<compile_context>
chip_gen: v6e
topology: v6e:2x2x1
jax: 0.10.0
libtpu: 0.0.40
codegen_flags: <defaults>
</compile_context>

<pallas_src>
import functools

import jax
import jax.numpy as jnp
from jax.experimental import pallas as pl
from jax.experimental.pallas import tpu as pltpu


def _round_up(x, m):
    return ((x + m - 1) // m) * m


def _vmem_budget_bytes():
    """Usable scoped-VMEM budget: physical capacity minus headroom, capped."""
    try:
        cap = int(pltpu.get_tpu_info().vmem_capacity_bytes)
    except Exception:
        cap = 64 * 1024 * 1024          # conservative (v7x-sized) fallback
    # Leave ~25% headroom for compiler-internal scratch; never ask for >100 MiB.
    return min(int(cap * 3 // 4), 100 * 1024 * 1024)


_VMEM_BUDGET = _vmem_budget_bytes()


def float16_module_kernel(x_ref, w_ref, b_ref, o_ref):
    k = pl.program_id(2)

    @pl.when(k == 0)
    def _():
        o_ref[...] = jnp.zeros_like(o_ref)

    # bf16 x bf16 MXU matmul, fp32 accumulation directly into the K-resident
    # fp32 output block (no scratch accumulator, no epilogue copy).
    o_ref[...] += jnp.dot(x_ref[...], w_ref[...],
                          preferred_element_type=jnp.float32)

    @pl.when(k == pl.num_programs(2) - 1)
    def _():
        # bias add once per output tile (not per K step); the wrapped module
        # materializes a bf16 output (module.bfloat16()), then
        # float16_to_fp32 restores fp32 on the last pipeline stage.
        y = o_ref[...] + b_ref[...].astype(jnp.float32)
        o_ref[...] = y.astype(jnp.bfloat16).astype(jnp.float32)


@functools.partial(jax.jit, static_argnames=("tm", "tn", "tk"))
def float16_module_forward(x_fp32, w_bf16, b_bf16, *, tm=512, tn=512, tk=1024):
    """x_fp32: [M, H] float32; w_bf16: [H, N] bfloat16; b_bf16: [1, N] bfloat16.
    Returns [M, N] float32 (fp32-restored output of the bf16 module).

    Defaults (tm=tn=512, tk=1024) keep the double-buffered footprint ~6 MiB,
    which fits every generation's VMEM (v7x: 64 MiB/TC).  On v5e/v6e
    (128 MiB VMEM) sweep tm/tn/tk upward (e.g. tn=1024, tk=2048); the wrapper
    derives vmem_limit_bytes from the chip so larger tiles actually compile.
    For skewed shapes prefer large tn when M*H bytes dominate and large tm
    when H*N dominates.  Keep Mp//tm * Np//tn >= 2 on megacore parts so both
    TensorCores get work under the "parallel" grid semantics."""
    M, H = x_fp32.shape
    H2, N = w_bf16.shape
    assert H == H2
    assert b_bf16.shape == (1, N)

    # Cap tiles by the alignment-padded dims so small / toy shapes still
    # satisfy the (8, 128) block divisibility rule.
    tm = min(tm, _round_up(M, 8))
    tn = min(tn, _round_up(N, 128))
    tk = min(tk, _round_up(H, 128))

    Mp = _round_up(M, tm)
    Np = _round_up(N, tn)
    Hp = _round_up(H, tk)

    # fp32_to_float16 pipeline stage: cast x once here (fused by XLA with the
    # pad below, so the alignment pass moves bf16 bytes, not fp32).
    x_bf16 = x_fp32.astype(jnp.bfloat16)

    # Zero-pad to tile multiples (zero rows/cols contribute nothing to the
    # reduction; padded output columns are sliced off below).
    if (Mp, Hp) != (M, H):
        x_bf16 = jnp.pad(x_bf16, ((0, Mp - M), (0, Hp - H)))
    if (Hp, Np) != (H, N):
        w_bf16 = jnp.pad(w_bf16, ((0, Hp - H), (0, Np - N)))
    if Np != N:
        b_bf16 = jnp.pad(b_bf16, ((0, 0), (0, Np - N)))

    grid = (Mp // tm, Np // tn, Hp // tk)

    # Double-buffered bf16 input tiles + bias + fp32 output tile.
    tile_bytes = (tm * tk * 2 + tk * tn * 2 + tn * 2 + tm * tn * 4) * 2
    vmem_limit = min(_VMEM_BUDGET, max(32 * 1024 * 1024, 2 * tile_bytes))

    # Actual HBM traffic: x re-read once per N-block, W re-read once per
    # M-block, plus bias and the fp32 output.
    cost = pl.CostEstimate(
        flops=2 * Mp * Np * Hp,
        transcendentals=0,
        bytes_accessed=(2 * Mp * Hp * (Np // tn)
                        + 2 * Hp * Np * (Mp // tm)
                        + 2 * Np
                        + 4 * Mp * Np),
    )

    out = pl.pallas_call(
        float16_module_kernel,
        out_shape=jax.ShapeDtypeStruct((Mp, Np), jnp.float32),
        grid_spec=pltpu.PrefetchScalarGridSpec(
            num_scalar_prefetch=0,
            grid=grid,
            in_specs=[
                pl.BlockSpec((tm, tk), lambda i, j, k: (i, k)),   # x  tile (bf16)
                pl.BlockSpec((tk, tn), lambda i, j, k: (k, j)),   # W  tile (bf16)
                pl.BlockSpec((1, tn), lambda i, j, k: (0, j)),    # bias tile
            ],
            out_specs=pl.BlockSpec((tm, tn), lambda i, j, k: (i, j)),
        ),
        compiler_params=pltpu.CompilerParams(
            dimension_semantics=("parallel", "parallel", "arbitrary"),
            vmem_limit_bytes=vmem_limit,
        ),
        cost_estimate=cost,
    )(x_bf16, w_bf16, b_bf16)

    return out[:M, :N]


def _reference_forward(x2d_fp32, w_bf16, b_bf16):
    """Plain-JAX reference with identical cast semantics: bf16 inputs/weights,
    fp32 accumulation, bias add in fp32, single bf16 round, fp32 upcast."""
    x_bf16 = x2d_fp32.astype(jnp.bfloat16)
    acc = jnp.dot(x_bf16, w_bf16, preferred_element_type=jnp.float32)
    acc = acc + b_bf16.astype(jnp.float32)
    return acc.astype(jnp.bfloat16).astype(jnp.float32)


if __name__ == "__main__":
    # TODO(synk): mpu pipeline-stage checks / state_dict plumbing are host-side
    # control flow with no kernel equivalent; the fused cast->module->cast hot
    # path is what is implemented here.
    key = jax.random.PRNGKey(0)

    # --- test 1: toy Megatron-like shapes (batch=2, seq=8, hidden=32, out=64)
    B, S, H, N = 2, 8, 32, 64
    kx, kw, kb, key = jax.random.split(key, 4)
    x = jax.random.normal(kx, (B, S, H), dtype=jnp.float32)
    w_bf16 = (jax.random.normal(kw, (H, N), dtype=jnp.float32) * 0.02
              ).astype(jnp.bfloat16)
    b_bf16 = (jax.random.normal(kb, (1, N), dtype=jnp.float32) * 0.02
              ).astype(jnp.bfloat16)

    x2d = x.reshape(B * S, H)
    out = float16_module_forward(x2d, w_bf16, b_bf16).reshape(B, S, N)
    jax.block_until_ready(out)
    ref = _reference_forward(x2d, w_bf16, b_bf16).reshape(B, S, N)
    assert out.dtype == jnp.float32
    assert jnp.allclose(out, ref, atol=1e-2, rtol=2e-2)

    # --- test 2: shapes that exercise the tiled grid + multi-step K reduction
    M2, H2, N2 = 256, 2048, 512   # grid = (1, 1, 2) with default tiles
    kx2, kw2, kb2, key = jax.random.split(key, 4)
    x2 = jax.random.normal(kx2, (M2, H2), dtype=jnp.float32)
    w2 = (jax.random.normal(kw2, (H2, N2), dtype=jnp.float32) * 0.02
          ).astype(jnp.bfloat16)
    b2 = (jax.random.normal(kb2, (1, N2), dtype=jnp.float32) * 0.02
          ).astype(jnp.bfloat16)

    out2 = float16_module_forward(x2, w2, b2)
    jax.block_until_ready(out2)
    ref2 = _reference_forward(x2, w2, b2)
    assert out2.dtype == jnp.float32
    assert jnp.allclose(out2, ref2, atol=1e-2, rtol=2e-2)

    print("KERNEL_OK")
</pallas_src>

<mosaic_0001>
module attributes {stable_mosaic.version = 11 : i64} {
  func.func @float16_module_kernel(%arg0: i32, %arg1: i32, %arg2: i32, %arg3: memref<16x128xbf16, #tpu.memory_space<vmem>>, %arg4: memref<128x128xbf16, #tpu.memory_space<vmem>>, %arg5: memref<1x128xbf16, #tpu.memory_space<vmem>>, %arg6: memref<16x128xf32, #tpu.memory_space<vmem>>) attributes {dimension_semantics = [#tpu.dimension_semantics<parallel>, #tpu.dimension_semantics<parallel>, #tpu.dimension_semantics<arbitrary>], iteration_bounds = array<i64: 1, 1, 1>, scalar_prefetch = 0 : i64, scratch_operands = 0 : i64, tpu.core_type = #tpu.core_type<tc>, window_params = [{transform_indices = @transform_0, window_bounds = array<i64: 16, 128>}, {transform_indices = @transform_1, window_bounds = array<i64: 128, 128>}, {transform_indices = @transform_2, window_bounds = array<i64: 1, 128>}, {transform_indices = @transform_3, window_bounds = array<i64: 16, 128>}]} {
    %c0_i32 = arith.constant 0 : i32
    %0 = arith.cmpi eq, %arg2, %c0_i32 : i32
    %1 = arith.extui %0 : i1 to i32
    %c0_i32_0 = arith.constant 0 : i32
    %2 = arith.cmpi ne, %1, %c0_i32_0 : i32
    scf.if %2 {
      %cst_10 = arith.constant 0.000000e+00 : f32
      %12 = vector.broadcast %cst_10 : f32 to vector<16x128xf32>
      %c0_11 = arith.constant 0 : index
      %c0_12 = arith.constant 0 : index
      %13 = vector.load %arg6[%c0_11, %c0_12] : memref<16x128xf32, #tpu.memory_space<vmem>>, vector<16x128xf32>
      tpu.vector_store %arg6[%c0_11, %c0_12], %12 {strides = array<i32>} : memref<16x128xf32, #tpu.memory_space<vmem>>, vector<16x128xf32>,
    } else {
    }
    %c0 = arith.constant 0 : index
    %c0_1 = arith.constant 0 : index
    %3 = vector.load %arg6[%c0, %c0_1] : memref<16x128xf32, #tpu.memory_space<vmem>>, vector<16x128xf32>
    %c0_2 = arith.constant 0 : index
    %c0_3 = arith.constant 0 : index
    %4 = vector.load %arg3[%c0_2, %c0_3] : memref<16x128xbf16, #tpu.memory_space<vmem>>, vector<16x128xbf16>
    %c0_4 = arith.constant 0 : index
    %c0_5 = arith.constant 0 : index
    %5 = vector.load %arg4[%c0_4, %c0_5] : memref<128x128xbf16, #tpu.memory_space<vmem>>, vector<128x128xbf16>
    %cst = arith.constant dense<0.000000e+00> : vector<16x128xf32>
    %6 = tpu.matmul %4, %5, %cst {dimension_numbers = #tpu.dot_dimension_numbers<[1], [0], [0], [1], [0, 0, 1, 1], [], []>} : vector<16x128xbf16>, vector<128x128xbf16>, vector<16x128xf32> -> vector<16x128xf32>
    %7 = arith.addf %3, %6 : vector<16x128xf32>
    %c0_6 = arith.constant 0 : index
    %c0_7 = arith.constant 0 : index
    %8 = vector.load %arg6[%c0_6, %c0_7] : memref<16x128xf32, #tpu.memory_space<vmem>>, vector<16x128xf32>
    tpu.vector_store %arg6[%c0_6, %c0_7], %7 {strides = array<i32>} : memref<16x128xf32, #tpu.memory_space<vmem>>, vector<16x128xf32>,
    %c0_i32_8 = arith.constant 0 : i32
    %9 = arith.cmpi eq, %arg2, %c0_i32_8 : i32
    %10 = arith.extui %9 : i1 to i32
    %c0_i32_9 = arith.constant 0 : i32
    %11 = arith.cmpi ne, %10, %c0_i32_9 : i32
    scf.if %11 {
      %c0_10 = arith.constant 0 : index
      %c0_11 = arith.constant 0 : index
      %12 = vector.load %arg6[%c0_10, %c0_11] : memref<16x128xf32, #tpu.memory_space<vmem>>, vector<16x128xf32>
      %c0_12 = arith.constant 0 : index
      %c0_13 = arith.constant 0 : index
      %13 = vector.load %arg5[%c0_12, %c0_13] : memref<1x128xbf16, #tpu.memory_space<vmem>>, vector<1x128xbf16>
      %14 = arith.extf %13 : vector<1x128xbf16> to vector<1x128xf32>
      %15 = vector.broadcast %14 : vector<1x128xf32> to vector<16x128xf32>
      %16 = arith.addf %12, %15 : vector<16x128xf32>
      %17 = arith.truncf %16 : vector<16x128xf32> to vector<16x128xbf16>
      %18 = arith.extf %17 : vector<16x128xbf16> to vector<16x128xf32>
      %c0_14 = arith.constant 0 : index
      %c0_15 = arith.constant 0 : index
      %19 = vector.load %arg6[%c0_14, %c0_15] : memref<16x128xf32, #tpu.memory_space<vmem>>, vector<16x128xf32>
      tpu.vector_store %arg6[%c0_14, %c0_15], %18 {strides = array<i32>} : memref<16x128xf32, #tpu.memory_space<vmem>>, vector<16x128xf32>,
    } else {
    }
    return
  }
  func.func @transform_0(%arg0: i32, %arg1: i32, %arg2: i32) -> (i32, i32) {
    %c0_i32 = arith.constant 0 : i32
    return %arg0, %arg2 : i32, i32
  }
  func.func @transform_1(%arg0: i32, %arg1: i32, %arg2: i32) -> (i32, i32) {
    %c0_i32 = arith.constant 0 : i32
    return %arg2, %arg1 : i32, i32
  }
  func.func @transform_2(%arg0: i32, %arg1: i32, %arg2: i32) -> (i32, i32) {
    %c0_i32 = arith.constant 0 : i32
    %c0_i32_0 = arith.constant 0 : i32
    return %c0_i32, %arg1 : i32, i32
  }
  func.func @transform_3(%arg0: i32, %arg1: i32, %arg2: i32) -> (i32, i32) {
    %c0_i32 = arith.constant 0 : i32
    return %arg0, %arg1 : i32, i32
  }
}

</mosaic_0001>

<llo_original>
// kernel: float16_module_forward.1
$region0: #{float16_module_forward.1}
  #allocation0 [shape = 'u32[]', space=smem, size = 0x4, offset = 0x4, fixed_abs, tag = 'smem constant byte address 0x4 - core index']
  #allocation1 [shape = 'u32[144,128]{1,0:T(1,128)}', space=vmem, size = 0x12000, scoped, tag = 'internal scratch']
  %s0 = inlined_call_operand.vmem [shape: bf16[16,128], index: 0, kind: input, shape index: {}]
  %s1 = inlined_call_operand.vmem [shape: bf16[128,128], index: 1, kind: input, shape index: {}]
  %s2 = inlined_call_operand.vmem [shape: bf16[1,128], index: 2, kind: input, shape index: {}]
  %s3 = inlined_call_operand.hbm [shape: f32[16,128], index: 3, kind: output, shape index: {}]
  %s4 = sld [smem:[#allocation0]]
  $region30: #{float16_module_forward.1} parent=0
    _
  %s6 = ssub.s32 1, %s4
  %s7 = scalar_select 0, %s6, %s4
  $region1: #{float16_module_forward.1} parent=0
    #allocation2 [shape = 'u8[8192]{0}', space=vmem, size = 0x2000, scoped, tag = 'output window, operand 0, single buffered']
    #allocation3 [shape = 's32[1]{0}', space=sflag, size = 0x4, scoped, tag = 'scoped memory for float16_module_forward.1']
    %8 = vsyncpa [#allocation3], 0
    // Predicated region
    $region2: #{float16_module_forward.1} parent=1 // pred_check
      _
    $region3: #{float16_module_forward.1} parent=1 // pred_check_branch
      %10 = sbr.rel (0) target = $region5
    $region4: #{float16_module_forward.1} parent=1 // pred_region
      _
    $region5: #{float16_module_forward.1} parent=1 // pred_fallthru
      _
    // Predicated region
    $region6: #{float16_module_forward.1} parent=1 // pred_check
      _
    $region7: #{float16_module_forward.1} parent=1 // pred_check_branch
      %12 = sbr.rel (0) target = $region9
    $region8: #{float16_module_forward.1} parent=1 // pred_region
      _
    $region9: #{float16_module_forward.1} parent=1 // pred_fallthru
      _
    // Predicated region
    $region10: #{float16_module_forward.1} parent=1 // pred_check
      _
    $region11: #{float16_module_forward.1} parent=1 // pred_check_branch
      %14 = sbr.rel (0) target = $region13
    $region12: #{float16_module_forward.1} parent=1 // pred_region
      _
    $region13: #{float16_module_forward.1} parent=1 // pred_fallthru
      _
    %p16 = scmp.eq.s32.totalorder 0, 0
    // Predicated region
    $region14: #{float16_module_forward.1} parent=1 // pred_check
      %p17 = pneg %p16
    $region15: #{float16_module_forward.1} parent=1 // pred_check_branch
      %19 = sbr.rel (%p17) target = $region17
    $region16: #{float16_module_forward.1} parent=1 // pred_region
      %20 = vst [vmem:[#allocation2] sm:$0xff] 0.0
      %21 = vst [vmem:[#allocation2 + $0x8] sm:$0xff] 0.0
    $region17: #{float16_module_forward.1} parent=1 // pred_fallthru
      _
    %v22 = vld [vmem:[#allocation2] sm:$0xff]
    %v23 = vld [vmem:[#allocation2 + $0x8] sm:$0xff]
    %v24 = vld [vmem:[%s0] sm:$0xf]
    %v25 = vld [vmem:[%s0 + $0x4] sm:$0xf]
    %v26 = vld [vmem:[%s1] sm:$0xf]
    %v27 = vld [vmem:[%s1 + $0x4] sm:$0xf]
    %v28 = vld [vmem:[%s1 + $0x8] sm:$0xf]
    %v29 = vld [vmem:[%s1 + $0xc] sm:$0xf]
    %v30 = vld [vmem:[%s1 + $0x10] sm:$0xf]
    %v31 = vld [vmem:[%s1 + $0x14] sm:$0xf]
    %v32 = vld [vmem:[%s1 + $0x18] sm:$0xf]
    %v33 = vld [vmem:[%s1 + $0x1c] sm:$0xf]
    %v34 = vld [vmem:[%s1 + $0x20] sm:$0xf]
    %v35 = vld [vmem:[%s1 + $0x24] sm:$0xf]
    %v36 = vld [vmem:[%s1 + $0x28] sm:$0xf]
    %v37 = vld [vmem:[%s1 + $0x2c] sm:$0xf]
    %v38 = vld [vmem:[%s1 + $0x30] sm:$0xf]
    %v39 = vld [vmem:[%s1 + $0x34] sm:$0xf]
    %v40 = vld [vmem:[%s1 + $0x38] sm:$0xf]
    %v41 = vld [vmem:[%s1 + $0x3c] sm:$0xf]
    %v44 = vunpack.c.l.b16 %v24
    %v45 = vunpack.c.l.b16 %v25
    %v46 = vpack.c.b16 %v45, %v44
    %v64 = vunpack.c.l.b16 %v26
    %v65 = vunpack.c.l.b16 %v27
    %v66 = vunpack.c.l.b16 %v28
    %v67 = vunpack.c.l.b16 %v29
    %v68 = vunpack.c.l.b16 %v30
    %v69 = vunpack.c.l.b16 %v31
    %v70 = vunpack.c.l.b16 %v32
    %v71 = vunpack.c.l.b16 %v33
    %v72 = vunpack.c.l.b16 %v34
    %v73 = vunpack.c.l.b16 %v35
    %v74 = vunpack.c.l.b16 %v36
    %v75 = vunpack.c.l.b16 %v37
    %v76 = vunpack.c.l.b16 %v38
    %v77 = vunpack.c.l.b16 %v39
    %v78 = vunpack.c.l.b16 %v40
    %v79 = vunpack.c.l.b16 %v41
    %v80 = vpack.c.b16 %v65, %v64
    %v81 = vpack.c.b16 %v67, %v66
    %v82 = vpack.c.b16 %v69, %v68
    %v83 = vpack.c.b16 %v71, %v70
    %v84 = vpack.c.b16 %v73, %v72
    %v85 = vpack.c.b16 %v75, %v74
    %v86 = vpack.c.b16 %v77, %v76
    %v87 = vpack.c.b16 %v79, %v78
    %96 = vmatprep.subr.bf16.mxu0 0
    %97 = vmatpush1.bf16.msra.mxu0 %v87
    %98 = vmatprep.subr.bf16.mxu0 0
    %99 = vmatpush1.bf16.msra.mxu0 %v86
    %100 = vmatprep.subr.bf16.mxu0 0
    %101 = vmatpush1.bf16.msra.mxu0 %v85
    %102 = vmatprep.subr.bf16.mxu0 0
    %103 = vmatpush1.bf16.msra.mxu0 %v84
    %104 = vmatprep.subr.bf16.mxu0 0
    %105 = vmatpush1.bf16.msra.mxu0 %v83
    %106 = vmatprep.subr.bf16.mxu0 0
    %107 = vmatpush1.bf16.msra.mxu0 %v82
    %108 = vmatprep.subr.bf16.mxu0 0
    %109 = vmatpush1.bf16.msra.mxu0 %v81
    %110 = vmatprep.subr.bf16.mxu0 0
    %111 = vmatpush1.bf16.msra.mxu0 %v80
    %112 = vmatprep.subr.bf16.mxu0 0
    %113 = vmatpush2.bf16.msra.mxu0 0
    %114 = vmatprep.subr.bf16.mxu0 0
    %115 = vmatpush2.bf16.msra.mxu0 0
    %116 = vmatprep.subr.bf16.mxu0 0
    %117 = vmatpush2.bf16.msra.mxu0 0
    %118 = vmatprep.subr.bf16.mxu0 0
    %119 = vmatpush2.bf16.msra.mxu0 0
    %120 = vmatprep.subr.bf16.mxu0 0
    %121 = vmatpush2.bf16.msra.mxu0 0
    %122 = vmatprep.subr.bf16.mxu0 0
    %123 = vmatpush2.bf16.msra.mxu0 0
    %124 = vmatprep.subr.bf16.mxu0 0
    %125 = vmatpush2.bf16.msra.mxu0 0
    %126 = vmatprep.subr.bf16.mxu0 0
    %127 = vmatpush2.bf16.msra.mxu0 0
    %128 = vmatprep.mubr.bf16.mxu0 0
    %129 = vmatmul.mubr.bf16.gmra.mxu0 %v46
    %v130 = vpop.f32.mrf.mxu0
    %v131 = vadd.f32 0.0, %v130
    %v132 = vpop.f32.mrf.mxu0
    %v133 = vpop.f32.mrf.mxu0
    %v134 = vadd.f32 0.0, %v133
    %v135 = vpop.f32.mrf.mxu0
    %136 = vdwg.mxu0
    %v137 = vadd.f32 %v22, %v131
    %v138 = vadd.f32 %v23, %v134
    %139 = vst [vmem:[#allocation2] sm:$0xff] %v137
    %140 = vst [vmem:[#allocation2 + $0x8] sm:$0xff] %v138
    // Predicated region
    $region18: #{float16_module_forward.1} parent=1 // pred_check
      %p141 = pneg %p16
    $region19: #{float16_module_forward.1} parent=1 // pred_check_branch
      %143 = sbr.rel (%p141) target = $region21
    $region20: #{float16_module_forward.1} parent=1 // pred_region
      %v144 = vld [vmem:[#allocation2] sm:$0xff]
      %v145 = vld [vmem:[#allocation2 + $0x8] sm:$0xff]
      %v146 = vld [vmem:[%s2] sm:$0x1]
      %v147 = vunpack.c.l.bf16 %v146
      %v148 = vlaneseq
      %v149 = vshrl.u32 %v148, 7
      %v150 = vsub.s32 0, %v149
      %v151 = vrot.slane %v147, %v150
      %v152 = vadd.f32 %v144, %v151
      %v153 = vadd.f32 %v145, %v151
      %v154 = vpack.c.bf16 %v153, %v152
      %v155 = vunpack.c.l.bf16 %v154
      %v156 = vunpack.c.h.bf16 %v154
      %157 = vst [vmem:[#allocation2] sm:$0xff] %v155
      %158 = vst [vmem:[#allocation2 + $0x8] sm:$0xff] %v156
    $region21: #{float16_module_forward.1} parent=1 // pred_fallthru
      _
    // Predicated region
    $region22: #{float16_module_forward.1} parent=1 // pred_check
      _
    $region23: #{float16_module_forward.1} parent=1 // pred_check_branch
      %160 = sbr.rel (0) target = $region25
    $region24: #{float16_module_forward.1} parent=1 // pred_region
      %s162 = ssub.s32 256, 256
      %163 = vsyncadd [#allocation3], %s162
      %s164 = sshll.u32 [#allocation2], 4
      %s165 = int_to_ptr.vmem [resolvable:$true] %s164
      %170 = dma.vmem_to_hbm [thread:$0]  %s165, 256, %s3, [#allocation3], 128, 128, 8
    $region25: #{float16_module_forward.1} parent=1 // pred_fallthru
      _
    // Predicated region
    $region26: #{float16_module_forward.1} parent=1 // pred_check
      _
    $region27: #{float16_module_forward.1} parent=1 // pred_check_branch
      %172 = sbr.rel (0) target = $region29
    $region28: #{float16_module_forward.1} parent=1 // pred_region
      %173 = dma.done [#allocation3], 256
    $region29: #{float16_module_forward.1} parent=1 // pred_fallthru
      _
    %174 = vsyncpa [#allocation3], 1

</llo_original>
